<compile_context>
chip_gen: v5e
topology: v5e:2x2
jax: 0.10.0
libtpu: 0.0.40
codegen_flags: <defaults>
</compile_context>

<pallas_src>
import functools

import jax
import jax.numpy as jnp
from jax.experimental import pallas as pl
from jax.experimental.pallas import tpu as pltpu


def _prompt_kernel(n_blk,          # static: number of class blocks
                   pids_ref,       # SMEM (n_blk*tc,) int32  (scalar prefetch)
                   tok_hbm,        # ANY  (N_total, max_L, D) raw HBM ref
                   sctx_ref,       # VMEM (1, n_ctx, D) subject ctx, group g
                   octx_ref,       # VMEM (1, n_ctx, D) object  ctx, group g
                   subj_out_ref,   # VMEM (1, tc, max_L, D)
                   obj_out_ref,    # VMEM (1, tc, max_L, D)
                   tok_buf,        # VMEM (n_buf, tc, max_L, D) gather buffers
                   sem):           # DMA semaphores (n_buf,)
    c = pl.program_id(0)                  # class-block index (outer)
    g = pl.program_id(1)                  # group index (inner)
    n_buf, tc, _, d = tok_buf.shape
    n_ctx = sctx_ref.shape[1]

    def start_gather(blk, slot):
        # One contiguous (max_L, D) DMA per class:
        #   token_embds[pids[blk*tc + i]] -> tok_buf[slot, i]
        for i in range(tc):
            pid = pids_ref[blk * tc + i]
            pltpu.make_async_copy(tok_hbm.at[pid], tok_buf.at[slot, i],
                                  sem.at[slot]).start()

    def wait_gather(slot):
        # One wait per started copy (identical sizes -> order independent).
        for i in range(tc):
            pltpu.make_async_copy(tok_hbm.at[0], tok_buf.at[slot, i],
                                  sem.at[slot]).wait()

    slot = (c & 1) if n_buf == 2 else 0

    # Prime the double buffer at the very first grid step.  Relies on the grid
    # executing sequentially from (0, 0): both grid axes are "arbitrary".
    @pl.when((c == 0) & (g == 0))
    def _():
        start_gather(0, 0)

    # Once per class block: kick off the prefetch of the next class block,
    # then wait for the current block's gather (the prefetch overlaps with the
    # n_grp output stores of this block).
    @pl.when(g == 0)
    def _():
        if n_blk > 1:                      # static: avoids tracing dead prefetch
            @pl.when(c + 1 < n_blk)
            def _():
                start_gather(c + 1, 1 - slot)
        wait_gather(slot)

    # Bulk copy of the gathered token slab into both outputs.  Two separate
    # statements so the whole (tc, max_L, D) value is not kept live across
    # both stores.
    subj_out_ref[0, :, :, :] = tok_buf[slot]
    obj_out_ref[0, :, :, :] = tok_buf[slot]

    # Overwrite only rows 1 : 1+n_ctx with the per-group learnable context,
    # broadcast over the tc classes of this block.
    s_ctx = jnp.broadcast_to(sctx_ref[...], (tc, n_ctx, d)).astype(subj_out_ref.dtype)
    o_ctx = jnp.broadcast_to(octx_ref[...], (tc, n_ctx, d)).astype(obj_out_ref.dtype)
    subj_out_ref[0, :, 1:1 + n_ctx, :] = s_ctx
    obj_out_ref[0, :, 1:1 + n_ctx, :] = o_ctx


@functools.partial(jax.jit, static_argnames=("block_classes",))
def prompt_learner_grouped_forward(pids, token_embds, token_mask,
                                   subj_ctx_embds, obj_ctx_embds,
                                   *, block_classes=8):
    """Pallas implementation of PromptLearner_Grouped.forward.

    Args:
      pids:            (n_cls_sel,) int32 class ids selected by the split.
      token_embds:     (N_total, max_L, D) float32 word-embedded class prompts
                       (rows 1:1+n_ctx are placeholders, overwritten by ctx).
      token_mask:      (N_total, max_L) int32 attention mask.
      subj_ctx_embds:  (n_grp, n_ctx, D) float32 learnable subject context.
      obj_ctx_embds:   (n_grp, n_ctx, D) float32 learnable object context.
      block_classes:   classes processed per grid step (tile-size knob;
                       8 is safe everywhere, 16-24 recommended on v6e/v7x).

    Returns:
      subj_token_embds: (n_grp * n_cls_sel, max_L, D)
      obj_token_embds:  (n_grp * n_cls_sel, max_L, D)
      token_mask_out:   (n_grp * n_cls_sel, max_L)
    """
    n_grp, n_ctx, D = subj_ctx_embds.shape
    n_cls = pids.shape[0]
    _, max_L, D2 = token_embds.shape
    assert D2 == D
    assert token_mask.shape[1] == max_L
    assert 1 + n_ctx <= max_L
    assert obj_ctx_embds.shape == subj_ctx_embds.shape

    dtype = token_embds.dtype

    # ----- class-block tiling ------------------------------------------------
    tc = max(1, min(block_classes, n_cls))
    n_blk = -(-n_cls // tc)          # ceil-div; the last block may be ragged
    n_buf = 2 if n_blk > 1 else 1    # double-buffer only when there is a "next"

    # Scalar-prefetched gather indices, padded so every block reads tc valid
    # class ids.  Duplicated ids only land in the ragged tail of the last
    # block, whose out-of-bounds output rows Pallas discards on writeback.
    pids = pids.astype(jnp.int32)
    n_pad = n_blk * tc - n_cls
    if n_pad > 0:
        pids_pad = jnp.concatenate([pids, jnp.broadcast_to(pids[-1:], (n_pad,))])
    else:
        pids_pad = pids

    out_shapes = (
        jax.ShapeDtypeStruct((n_grp, n_cls, max_L, D), dtype),
        jax.ShapeDtypeStruct((n_grp, n_cls, max_L, D), dtype),
    )

    grid_spec = pltpu.PrefetchScalarGridSpec(
        num_scalar_prefetch=1,            # pids_pad -> SMEM
        grid=(n_blk, n_grp),              # class-block outer, group inner
        in_specs=[
            pl.BlockSpec(memory_space=pl.ANY),                          # token_embds stays in HBM
            pl.BlockSpec((1, n_ctx, D), lambda c, g, pids: (g, 0, 0)),  # subj ctx
            pl.BlockSpec((1, n_ctx, D), lambda c, g, pids: (g, 0, 0)),  # obj ctx
        ],
        out_specs=[
            pl.BlockSpec((1, tc, max_L, D), lambda c, g, pids: (g, c, 0, 0)),
            pl.BlockSpec((1, tc, max_L, D), lambda c, g, pids: (g, c, 0, 0)),
        ],
        scratch_shapes=[
            pltpu.VMEM((n_buf, tc, max_L, D), dtype),   # gathered token slabs
            pltpu.SemaphoreType.DMA((n_buf,)),          # one DMA sem per slab
        ],
    )

    # VMEM budget: gather buffers (n_buf slabs) + double-buffered output
    # blocks (2 outputs x 2 buffers) + small ctx blocks; generous margin,
    # capped below v7x's 64 MiB physical VMEM (v5e/v6e have 128 MiB).
    blk_bytes = tc * max_L * D * jnp.dtype(dtype).itemsize
    vmem_limit = int(min(48 * 1024 * 1024, max(32 * 1024 * 1024, 8 * blk_bytes)))

    subj_out, obj_out = pl.pallas_call(
        functools.partial(_prompt_kernel, n_blk),
        out_shape=out_shapes,
        grid_spec=grid_spec,
        compiler_params=pltpu.CompilerParams(
            # Both axes "arbitrary": the manual double-buffered gather primes
            # at grid step (0, 0) and assumes strictly sequential execution;
            # a megacore split would break that (and this kernel is pure HBM
            # bandwidth anyway).
            dimension_semantics=("arbitrary", "arbitrary"),
            vmem_limit_bytes=vmem_limit),
    )(pids_pad, token_embds, subj_ctx_embds, obj_ctx_embds)

    # Output class axis is exactly n_cls, so the reshape below is a free
    # bitcast (no padded-slice copy of the outputs).
    subj = subj_out.reshape(n_grp * n_cls, max_L, D)
    obj = obj_out.reshape(n_grp * n_cls, max_L, D)

    # Mask replication stays in plain XLA (tiny, lane-sparse).
    mask = jnp.tile(jnp.take(token_mask, pids, axis=0), (n_grp, 1))
    return subj, obj, mask


def _reference_forward(pids, token_embds, token_mask, subj_ctx_embds, obj_ctx_embds):
    """Pure-JAX mirror of the PyTorch PromptLearner_Grouped.forward."""
    n_grp, n_ctx, D = subj_ctx_embds.shape
    n_cls = pids.shape[0]
    max_L = token_mask.shape[1]
    prefix = token_embds[pids, :1, :]                          # (C, 1, D)
    suffix = token_embds[pids, 1 + n_ctx:, :]                  # (C, Ls, D)
    prefix = jnp.broadcast_to(prefix[None], (n_grp,) + prefix.shape)
    suffix = jnp.broadcast_to(suffix[None], (n_grp,) + suffix.shape)
    s_ctx = jnp.broadcast_to(subj_ctx_embds[:, None], (n_grp, n_cls, n_ctx, D))
    o_ctx = jnp.broadcast_to(obj_ctx_embds[:, None], (n_grp, n_cls, n_ctx, D))
    subj = jnp.concatenate([prefix, s_ctx, suffix], axis=2).reshape(n_grp * n_cls, max_L, D)
    obj = jnp.concatenate([prefix, o_ctx, suffix], axis=2).reshape(n_grp * n_cls, max_L, D)
    mask = jnp.tile(token_mask[pids], (n_grp, 1))
    return subj, obj, mask


if __name__ == "__main__":
    # Small synthetic config consistent with the module's structure.
    n_groups = 2        # n_grp
    n_ctx = 4           # n_context
    D = 128             # hidden size (768 in the real model; kept small here)
    max_L = 16          # max_txt_len
    num_base = 3
    num_novel = 2
    n_total = 1 + num_base + num_novel   # class id 0 + base + novel

    key = jax.random.PRNGKey(0)
    k_tok, k_sctx, k_octx = jax.random.split(key, 3)

    # Deterministic "word embedding" outputs for the tokenized class prompts.
    token_embds = jax.random.normal(k_tok, (n_total, max_L, D), jnp.float32)

    # Attention mask: [CLS] + n_ctx placeholders + ~2 name tokens + [SEP].
    valid_len = 1 + n_ctx + 3
    token_mask = (jnp.arange(max_L)[None, :] < valid_len).astype(jnp.int32)
    token_mask = jnp.tile(token_mask, (n_total, 1))            # (n_total, max_L)

    # Learnable grouped context embeddings, std=0.02 normal init.
    subj_ctx_embds = 0.02 * jax.random.normal(k_sctx, (n_groups, n_ctx, D), jnp.float32)
    obj_ctx_embds = 0.02 * jax.random.normal(k_octx, (n_groups, n_ctx, D), jnp.float32)

    # split == 'all'  ->  pids_list = range(1, num_base + num_novel + 1)
    pids = jnp.arange(1, num_base + num_novel + 1, dtype=jnp.int32)

    subj_ref, obj_ref, mask_ref = _reference_forward(
        pids, token_embds, token_mask, subj_ctx_embds, obj_ctx_embds)

    # bc=8: single class block (no prefetch path, tc=5)
    # bc=4: two blocks, ragged last block (tc=4, classes 4..7 clamped)
    # bc=2: three blocks, exercises the prefetch chain + ragged tail
    for bc in (8, 4, 2):
        subj, obj, mask = prompt_learner_grouped_forward(
            pids, token_embds, token_mask, subj_ctx_embds, obj_ctx_embds,
            block_classes=bc)
        jax.block_until_ready((subj, obj, mask))

        assert subj.shape == (n_groups * pids.shape[0], max_L, D)
        assert obj.shape == (n_groups * pids.shape[0], max_L, D)
        assert mask.shape == (n_groups * pids.shape[0], max_L)
        assert jnp.allclose(subj, subj_ref)
        assert jnp.allclose(obj, obj_ref)
        assert jnp.array_equal(mask, mask_ref)

    print("KERNEL_OK")
</pallas_src>

<mosaic_0001>
module attributes {stable_mosaic.version = 11 : i64} {
  func.func @_prompt_kernel(%arg0: i32, %arg1: i32, %arg2: memref<5xi32, #tpu.memory_space<smem>>, %arg3: memref<6x16x128xf32, #tpu.memory_space<any>>, %arg4: memref<1x4x128xf32, #tpu.memory_space<vmem>>, %arg5: memref<1x4x128xf32, #tpu.memory_space<vmem>>, %arg6: memref<1x5x16x128xf32, #tpu.memory_space<vmem>>, %arg7: memref<1x5x16x128xf32, #tpu.memory_space<vmem>>, %arg8: memref<1x5x16x128xf32, #tpu.memory_space<vmem>>, %arg9: memref<1x!tpu.dma_semaphore, #tpu.memory_space<semaphore_mem>>) attributes {dimension_semantics = [#tpu.dimension_semantics<arbitrary>, #tpu.dimension_semantics<arbitrary>], iteration_bounds = array<i64: 1, 2>, scalar_prefetch = 1 : i64, scratch_operands = 2 : i64, tpu.core_type = #tpu.core_type<tc>, window_params = [{}, {transform_indices = @transform_1, window_bounds = array<i64: 1, 4, 128>}, {transform_indices = @transform_2, window_bounds = array<i64: 1, 4, 128>}, {transform_indices = @transform_3, window_bounds = array<i64: 1, 5, 16, 128>}, {transform_indices = @transform_4, window_bounds = array<i64: 1, 5, 16, 128>}]} {
    %c0_i32 = arith.constant 0 : i32
    %0 = arith.cmpi eq, %arg0, %c0_i32 : i32
    %c0_i32_0 = arith.constant 0 : i32
    %1 = arith.cmpi eq, %arg1, %c0_i32_0 : i32
    %2 = arith.andi %0, %1 : i1
    %3 = arith.extui %2 : i1 to i32
    %c0_i32_1 = arith.constant 0 : i32
    %4 = arith.cmpi ne, %3, %c0_i32_1 : i32
    scf.if %4 {
      %c0_32 = arith.constant 0 : index
      %30 = memref.load %arg2[%c0_32] : memref<5xi32, #tpu.memory_space<smem>>
      %c0_i32_33 = arith.constant 0 : i32
      %c0_i32_34 = arith.constant 0 : i32
      %c0_i32_35 = arith.constant 0 : i32
      %c0_i32_36 = arith.constant 0 : i32
      %c0_i32_37 = arith.constant 0 : i32
      %31 = tpu.memref_slice %arg3[%30, %c0_i32_36, %c0_i32_37] : memref<6x16x128xf32, #tpu.memory_space<any>> -> memref<1x16x128xf32, #tpu.memory_space<any>>
      %32 = tpu.memref_squeeze %31 : memref<1x16x128xf32, #tpu.memory_space<any>> -> memref<16x128xf32, #tpu.memory_space<any>>
      %c0_i32_38 = arith.constant 0 : i32
      %c0_i32_39 = arith.constant 0 : i32
      %33 = tpu.memref_slice %arg8[%c0_i32_33, %c0_i32_34, %c0_i32_38, %c0_i32_39] : memref<1x5x16x128xf32, #tpu.memory_space<vmem>> -> memref<1x1x16x128xf32, #tpu.memory_space<vmem>>
      %34 = tpu.memref_squeeze %33 : memref<1x1x16x128xf32, #tpu.memory_space<vmem>> -> memref<16x128xf32, #tpu.memory_space<vmem>>
      %35 = tpu.memref_slice %arg9[%c0_i32_35] : memref<1x!tpu.dma_semaphore, #tpu.memory_space<semaphore_mem>> -> memref<1x!tpu.dma_semaphore, #tpu.memory_space<semaphore_mem>>
      %36 = tpu.memref_squeeze %35 : memref<1x!tpu.dma_semaphore, #tpu.memory_space<semaphore_mem>> -> memref<!tpu.dma_semaphore, #tpu.memory_space<semaphore_mem>>
      tpu.enqueue_dma source(%32 : memref<16x128xf32, #tpu.memory_space<any>>) target(%34 : memref<16x128xf32, #tpu.memory_space<vmem>>) target_semaphore(%36 : memref<!tpu.dma_semaphore, #tpu.memory_space<semaphore_mem>>)
      %c1_40 = arith.constant 1 : index
      %37 = memref.load %arg2[%c1_40] : memref<5xi32, #tpu.memory_space<smem>>
      %c0_i32_41 = arith.constant 0 : i32
      %c1_i32 = arith.constant 1 : i32
      %c0_i32_42 = arith.constant 0 : i32
      %c0_i32_43 = arith.constant 0 : i32
      %c0_i32_44 = arith.constant 0 : i32
      %38 = tpu.memref_slice %arg3[%37, %c0_i32_43, %c0_i32_44] : memref<6x16x128xf32, #tpu.memory_space<any>> -> memref<1x16x128xf32, #tpu.memory_space<any>>
      %39 = tpu.memref_squeeze %38 : memref<1x16x128xf32, #tpu.memory_space<any>> -> memref<16x128xf32, #tpu.memory_space<any>>
      %c0_i32_45 = arith.constant 0 : i32
      %c0_i32_46 = arith.constant 0 : i32
      %40 = tpu.memref_slice %arg8[%c0_i32_41, %c1_i32, %c0_i32_45, %c0_i32_46] : memref<1x5x16x128xf32, #tpu.memory_space<vmem>> -> memref<1x1x16x128xf32, #tpu.memory_space<vmem>>
      %41 = tpu.memref_squeeze %40 : memref<1x1x16x128xf32, #tpu.memory_space<vmem>> -> memref<16x128xf32, #tpu.memory_space<vmem>>
      %42 = tpu.memref_slice %arg9[%c0_i32_42] : memref<1x!tpu.dma_semaphore, #tpu.memory_space<semaphore_mem>> -> memref<1x!tpu.dma_semaphore, #tpu.memory_space<semaphore_mem>>
      %43 = tpu.memref_squeeze %42 : memref<1x!tpu.dma_semaphore, #tpu.memory_space<semaphore_mem>> -> memref<!tpu.dma_semaphore, #tpu.memory_space<semaphore_mem>>
      tpu.enqueue_dma source(%39 : memref<16x128xf32, #tpu.memory_space<any>>) target(%41 : memref<16x128xf32, #tpu.memory_space<vmem>>) target_semaphore(%43 : memref<!tpu.dma_semaphore, #tpu.memory_space<semaphore_mem>>)
      %c2 = arith.constant 2 : index
      %44 = memref.load %arg2[%c2] : memref<5xi32, #tpu.memory_space<smem>>
      %c0_i32_47 = arith.constant 0 : i32
      %c2_i32 = arith.constant 2 : i32
      %c0_i32_48 = arith.constant 0 : i32
      %c0_i32_49 = arith.constant 0 : i32
      %c0_i32_50 = arith.constant 0 : i32
      %45 = tpu.memref_slice %arg3[%44, %c0_i32_49, %c0_i32_50] : memref<6x16x128xf32, #tpu.memory_space<any>> -> memref<1x16x128xf32, #tpu.memory_space<any>>
      %46 = tpu.memref_squeeze %45 : memref<1x16x128xf32, #tpu.memory_space<any>> -> memref<16x128xf32, #tpu.memory_space<any>>
      %c0_i32_51 = arith.constant 0 : i32
      %c0_i32_52 = arith.constant 0 : i32
      %47 = tpu.memref_slice %arg8[%c0_i32_47, %c2_i32, %c0_i32_51, %c0_i32_52] : memref<1x5x16x128xf32, #tpu.memory_space<vmem>> -> memref<1x1x16x128xf32, #tpu.memory_space<vmem>>
      %48 = tpu.memref_squeeze %47 : memref<1x1x16x128xf32, #tpu.memory_space<vmem>> -> memref<16x128xf32, #tpu.memory_space<vmem>>
      %49 = tpu.memref_slice %arg9[%c0_i32_48] : memref<1x!tpu.dma_semaphore, #tpu.memory_space<semaphore_mem>> -> memref<1x!tpu.dma_semaphore, #tpu.memory_space<semaphore_mem>>
      %50 = tpu.memref_squeeze %49 : memref<1x!tpu.dma_semaphore, #tpu.memory_space<semaphore_mem>> -> memref<!tpu.dma_semaphore, #tpu.memory_space<semaphore_mem>>
      tpu.enqueue_dma source(%46 : memref<16x128xf32, #tpu.memory_space<any>>) target(%48 : memref<16x128xf32, #tpu.memory_space<vmem>>) target_semaphore(%50 : memref<!tpu.dma_semaphore, #tpu.memory_space<semaphore_mem>>)
      %c3 = arith.constant 3 : index
      %51 = memref.load %arg2[%c3] : memref<5xi32, #tpu.memory_space<smem>>
      %c0_i32_53 = arith.constant 0 : i32
      %c3_i32 = arith.constant 3 : i32
      %c0_i32_54 = arith.constant 0 : i32
      %c0_i32_55 = arith.constant 0 : i32
      %c0_i32_56 = arith.constant 0 : i32
      %52 = tpu.memref_slice %arg3[%51, %c0_i32_55, %c0_i32_56] : memref<6x16x128xf32, #tpu.memory_space<any>> -> memref<1x16x128xf32, #tpu.memory_space<any>>
      %53 = tpu.memref_squeeze %52 : memref<1x16x128xf32, #tpu.memory_space<any>> -> memref<16x128xf32, #tpu.memory_space<any>>
      %c0_i32_57 = arith.constant 0 : i32
      %c0_i32_58 = arith.constant 0 : i32
      %54 = tpu.memref_slice %arg8[%c0_i32_53, %c3_i32, %c0_i32_57, %c0_i32_58] : memref<1x5x16x128xf32, #tpu.memory_space<vmem>> -> memref<1x1x16x128xf32, #tpu.memory_space<vmem>>
      %55 = tpu.memref_squeeze %54 : memref<1x1x16x128xf32, #tpu.memory_space<vmem>> -> memref<16x128xf32, #tpu.memory_space<vmem>>
      %56 = tpu.memref_slice %arg9[%c0_i32_54] : memref<1x!tpu.dma_semaphore, #tpu.memory_space<semaphore_mem>> -> memref<1x!tpu.dma_semaphore, #tpu.memory_space<semaphore_mem>>
      %57 = tpu.memref_squeeze %56 : memref<1x!tpu.dma_semaphore, #tpu.memory_space<semaphore_mem>> -> memref<!tpu.dma_semaphore, #tpu.memory_space<semaphore_mem>>
      tpu.enqueue_dma source(%53 : memref<16x128xf32, #tpu.memory_space<any>>) target(%55 : memref<16x128xf32, #tpu.memory_space<vmem>>) target_semaphore(%57 : memref<!tpu.dma_semaphore, #tpu.memory_space<semaphore_mem>>)
      %c4 = arith.constant 4 : index
      %58 = memref.load %arg2[%c4] : memref<5xi32, #tpu.memory_space<smem>>
      %c0_i32_59 = arith.constant 0 : i32
      %c4_i32 = arith.constant 4 : i32
      %c0_i32_60 = arith.constant 0 : i32
      %c0_i32_61 = arith.constant 0 : i32
      %c0_i32_62 = arith.constant 0 : i32
      %59 = tpu.memref_slice %arg3[%58, %c0_i32_61, %c0_i32_62] : memref<6x16x128xf32, #tpu.memory_space<any>> -> memref<1x16x128xf32, #tpu.memory_space<any>>
      %60 = tpu.memref_squeeze %59 : memref<1x16x128xf32, #tpu.memory_space<any>> -> memref<16x128xf32, #tpu.memory_space<any>>
      %c0_i32_63 = arith.constant 0 : i32
      %c0_i32_64 = arith.constant 0 : i32
      %61 = tpu.memref_slice %arg8[%c0_i32_59, %c4_i32, %c0_i32_63, %c0_i32_64] : memref<1x5x16x128xf32, #tpu.memory_space<vmem>> -> memref<1x1x16x128xf32, #tpu.memory_space<vmem>>
      %62 = tpu.memref_squeeze %61 : memref<1x1x16x128xf32, #tpu.memory_space<vmem>> -> memref<16x128xf32, #tpu.memory_space<vmem>>
      %63 = tpu.memref_slice %arg9[%c0_i32_60] : memref<1x!tpu.dma_semaphore, #tpu.memory_space<semaphore_mem>> -> memref<1x!tpu.dma_semaphore, #tpu.memory_space<semaphore_mem>>
      %64 = tpu.memref_squeeze %63 : memref<1x!tpu.dma_semaphore, #tpu.memory_space<semaphore_mem>> -> memref<!tpu.dma_semaphore, #tpu.memory_space<semaphore_mem>>
      tpu.enqueue_dma source(%60 : memref<16x128xf32, #tpu.memory_space<any>>) target(%62 : memref<16x128xf32, #tpu.memory_space<vmem>>) target_semaphore(%64 : memref<!tpu.dma_semaphore, #tpu.memory_space<semaphore_mem>>)
    } else {
    }
    %c0_i32_2 = arith.constant 0 : i32
    %5 = arith.cmpi eq, %arg1, %c0_i32_2 : i32
    %6 = arith.extui %5 : i1 to i32
    %c0_i32_3 = arith.constant 0 : i32
    %7 = arith.cmpi ne, %6, %c0_i32_3 : i32
    scf.if %7 {
      %c0_i32_32 = arith.constant 0 : i32
      %c0_i32_33 = arith.constant 0 : i32
      %c0_i32_34 = arith.constant 0 : i32
      %c0_i32_35 = arith.constant 0 : i32
      %c0_i32_36 = arith.constant 0 : i32
      %c0_i32_37 = arith.constant 0 : i32
      %30 = tpu.memref_slice %arg3[%c0_i32_32, %c0_i32_36, %c0_i32_37] : memref<6x16x128xf32, #tpu.memory_space<any>> -> memref<1x16x128xf32, #tpu.memory_space<any>>
      %31 = tpu.memref_squeeze %30 : memref<1x16x128xf32, #tpu.memory_space<any>> -> memref<16x128xf32, #tpu.memory_space<any>>
      %c0_i32_38 = arith.constant 0 : i32
      %c0_i32_39 = arith.constant 0 : i32
      %32 = tpu.memref_slice %arg8[%c0_i32_33, %c0_i32_34, %c0_i32_38, %c0_i32_39] : memref<1x5x16x128xf32, #tpu.memory_space<vmem>> -> memref<1x1x16x128xf32, #tpu.memory_space<vmem>>
      %33 = tpu.memref_squeeze %32 : memref<1x1x16x128xf32, #tpu.memory_space<vmem>> -> memref<16x128xf32, #tpu.memory_space<vmem>>
      %34 = tpu.memref_slice %arg9[%c0_i32_35] : memref<1x!tpu.dma_semaphore, #tpu.memory_space<semaphore_mem>> -> memref<1x!tpu.dma_semaphore, #tpu.memory_space<semaphore_mem>>
      %35 = tpu.memref_squeeze %34 : memref<1x!tpu.dma_semaphore, #tpu.memory_space<semaphore_mem>> -> memref<!tpu.dma_semaphore, #tpu.memory_space<semaphore_mem>>
      tpu.wait_dma2 semaphore(%35 : memref<!tpu.dma_semaphore, #tpu.memory_space<semaphore_mem>>) src(%31 : memref<16x128xf32, #tpu.memory_space<any>>) dst(%33 : memref<16x128xf32, #tpu.memory_space<vmem>>)
      %c0_i32_40 = arith.constant 0 : i32
      %c0_i32_41 = arith.constant 0 : i32
      %c1_i32 = arith.constant 1 : i32
      %c0_i32_42 = arith.constant 0 : i32
      %c0_i32_43 = arith.constant 0 : i32
      %c0_i32_44 = arith.constant 0 : i32
      %36 = tpu.memref_slice %arg3[%c0_i32_40, %c0_i32_43, %c0_i32_44] : memref<6x16x128xf32, #tpu.memory_space<any>> -> memref<1x16x128xf32, #tpu.memory_space<any>>
      %37 = tpu.memref_squeeze %36 : memref<1x16x128xf32, #tpu.memory_space<any>> -> memref<16x128xf32, #tpu.memory_space<any>>
      %c0_i32_45 = arith.constant 0 : i32
      %c0_i32_46 = arith.constant 0 : i32
      %38 = tpu.memref_slice %arg8[%c0_i32_41, %c1_i32, %c0_i32_45, %c0_i32_46] : memref<1x5x16x128xf32, #tpu.memory_space<vmem>> -> memref<1x1x16x128xf32, #tpu.memory_space<vmem>>
      %39 = tpu.memref_squeeze %38 : memref<1x1x16x128xf32, #tpu.memory_space<vmem>> -> memref<16x128xf32, #tpu.memory_space<vmem>>
      %40 = tpu.memref_slice %arg9[%c0_i32_42] : memref<1x!tpu.dma_semaphore, #tpu.memory_space<semaphore_mem>> -> memref<1x!tpu.dma_semaphore, #tpu.memory_space<semaphore_mem>>
      %41 = tpu.memref_squeeze %40 : memref<1x!tpu.dma_semaphore, #tpu.memory_space<semaphore_mem>> -> memref<!tpu.dma_semaphore, #tpu.memory_space<semaphore_mem>>
      tpu.wait_dma2 semaphore(%41 : memref<!tpu.dma_semaphore, #tpu.memory_space<semaphore_mem>>) src(%37 : memref<16x128xf32, #tpu.memory_space<any>>) dst(%39 : memref<16x128xf32, #tpu.memory_space<vmem>>)
      %c0_i32_47 = arith.constant 0 : i32
      %c0_i32_48 = arith.constant 0 : i32
      %c2_i32 = arith.constant 2 : i32
      %c0_i32_49 = arith.constant 0 : i32
      %c0_i32_50 = arith.constant 0 : i32
      %c0_i32_51 = arith.constant 0 : i32
      %42 = tpu.memref_slice %arg3[%c0_i32_47, %c0_i32_50, %c0_i32_51] : memref<6x16x128xf32, #tpu.memory_space<any>> -> memref<1x16x128xf32, #tpu.memory_space<any>>
      %43 = tpu.memref_squeeze %42 : memref<1x16x128xf32, #tpu.memory_space<any>> -> memref<16x128xf32, #tpu.memory_space<any>>
      %c0_i32_52 = arith.constant 0 : i32
      %c0_i32_53 = arith.constant 0 : i32
      %44 = tpu.memref_slice %arg8[%c0_i32_48, %c2_i32, %c0_i32_52, %c0_i32_53] : memref<1x5x16x128xf32, #tpu.memory_space<vmem>> -> memref<1x1x16x128xf32, #tpu.memory_space<vmem>>
      %45 = tpu.memref_squeeze %44 : memref<1x1x16x128xf32, #tpu.memory_space<vmem>> -> memref<16x128xf32, #tpu.memory_space<vmem>>
      %46 = tpu.memref_slice %arg9[%c0_i32_49] : memref<1x!tpu.dma_semaphore, #tpu.memory_space<semaphore_mem>> -> memref<1x!tpu.dma_semaphore, #tpu.memory_space<semaphore_mem>>
      %47 = tpu.memref_squeeze %46 : memref<1x!tpu.dma_semaphore, #tpu.memory_space<semaphore_mem>> -> memref<!tpu.dma_semaphore, #tpu.memory_space<semaphore_mem>>
      tpu.wait_dma2 semaphore(%47 : memref<!tpu.dma_semaphore, #tpu.memory_space<semaphore_mem>>) src(%43 : memref<16x128xf32, #tpu.memory_space<any>>) dst(%45 : memref<16x128xf32, #tpu.memory_space<vmem>>)
      %c0_i32_54 = arith.constant 0 : i32
      %c0_i32_55 = arith.constant 0 : i32
      %c3_i32 = arith.constant 3 : i32
      %c0_i32_56 = arith.constant 0 : i32
      %c0_i32_57 = arith.constant 0 : i32
      %c0_i32_58 = arith.constant 0 : i32
      %48 = tpu.memref_slice %arg3[%c0_i32_54, %c0_i32_57, %c0_i32_58] : memref<6x16x128xf32, #tpu.memory_space<any>> -> memref<1x16x128xf32, #tpu.memory_space<any>>
      %49 = tpu.memref_squeeze %48 : memref<1x16x128xf32, #tpu.memory_space<any>> -> memref<16x128xf32, #tpu.memory_space<any>>
      %c0_i32_59 = arith.constant 0 : i32
      %c0_i32_60 = arith.constant 0 : i32
      %50 = tpu.memref_slice %arg8[%c0_i32_55, %c3_i32, %c0_i32_59, %c0_i32_60] : memref<1x5x16x128xf32, #tpu.memory_space<vmem>> -> memref<1x1x16x128xf32, #tpu.memory_space<vmem>>
      %51 = tpu.memref_squeeze %50 : memref<1x1x16x128xf32, #tpu.memory_space<vmem>> -> memref<16x128xf32, #tpu.memory_space<vmem>>
      %52 = tpu.memref_slice %arg9[%c0_i32_56] : memref<1x!tpu.dma_semaphore, #tpu.memory_space<semaphore_mem>> -> memref<1x!tpu.dma_semaphore, #tpu.memory_space<semaphore_mem>>
      %53 = tpu.memref_squeeze %52 : memref<1x!tpu.dma_semaphore, #tpu.memory_space<semaphore_mem>> -> memref<!tpu.dma_semaphore, #tpu.memory_space<semaphore_mem>>
      tpu.wait_dma2 semaphore(%53 : memref<!tpu.dma_semaphore, #tpu.memory_space<semaphore_mem>>) src(%49 : memref<16x128xf32, #tpu.memory_space<any>>) dst(%51 : memref<16x128xf32, #tpu.memory_space<vmem>>)
      %c0_i32_61 = arith.constant 0 : i32
      %c0_i32_62 = arith.constant 0 : i32
      %c4_i32 = arith.constant 4 : i32
      %c0_i32_63 = arith.constant 0 : i32
      %c0_i32_64 = arith.constant 0 : i32
      %c0_i32_65 = arith.constant 0 : i32
      %54 = tpu.memref_slice %arg3[%c0_i32_61, %c0_i32_64, %c0_i32_65] : memref<6x16x128xf32, #tpu.memory_space<any>> -> memref<1x16x128xf32, #tpu.memory_space<any>>
      %55 = tpu.memref_squeeze %54 : memref<1x16x128xf32, #tpu.memory_space<any>> -> memref<16x128xf32, #tpu.memory_space<any>>
      %c0_i32_66 = arith.constant 0 : i32
      %c0_i32_67 = arith.constant 0 : i32
      %56 = tpu.memref_slice %arg8[%c0_i32_62, %c4_i32, %c0_i32_66, %c0_i32_67] : memref<1x5x16x128xf32, #tpu.memory_space<vmem>> -> memref<1x1x16x128xf32, #tpu.memory_space<vmem>>
      %57 = tpu.memref_squeeze %56 : memref<1x1x16x128xf32, #tpu.memory_space<vmem>> -> memref<16x128xf32, #tpu.memory_space<vmem>>
      %58 = tpu.memref_slice %arg9[%c0_i32_63] : memref<1x!tpu.dma_semaphore, #tpu.memory_space<semaphore_mem>> -> memref<1x!tpu.dma_semaphore, #tpu.memory_space<semaphore_mem>>
      %59 = tpu.memref_squeeze %58 : memref<1x!tpu.dma_semaphore, #tpu.memory_space<semaphore_mem>> -> memref<!tpu.dma_semaphore, #tpu.memory_space<semaphore_mem>>
      tpu.wait_dma2 semaphore(%59 : memref<!tpu.dma_semaphore, #tpu.memory_space<semaphore_mem>>) src(%55 : memref<16x128xf32, #tpu.memory_space<any>>) dst(%57 : memref<16x128xf32, #tpu.memory_space<vmem>>)
    } else {
    }
    %c0 = arith.constant 0 : index
    %c0_4 = arith.constant 0 : index
    %c0_5 = arith.constant 0 : index
    %c0_6 = arith.constant 0 : index
    %8 = vector.load %arg8[%c0, %c0_4, %c0_5, %c0_6] : memref<1x5x16x128xf32, #tpu.memory_space<vmem>>, vector<1x5x16x128xf32>
    %9 = vector.shape_cast %8 : vector<1x5x16x128xf32> to vector<5x16x128xf32>
    %c0_7 = arith.constant 0 : index
    %c0_8 = arith.constant 0 : index
    %c0_9 = arith.constant 0 : index
    %c0_10 = arith.constant 0 : index
    %10 = vector.load %arg6[%c0_7, %c0_8, %c0_9, %c0_10] : memref<1x5x16x128xf32, #tpu.memory_space<vmem>>, vector<1x5x16x128xf32>
    %11 = vector.shape_cast %10 : vector<1x5x16x128xf32> to vector<5x16x128xf32>
    %12 = vector.shape_cast %9 : vector<5x16x128xf32> to vector<1x5x16x128xf32>
    tpu.vector_store %arg6[%c0_7, %c0_8, %c0_9, %c0_10], %12 {strides = array<i32>} : memref<1x5x16x128xf32, #tpu.memory_space<vmem>>, vector<1x5x16x128xf32>,
    %c0_11 = arith.constant 0 : index
    %c0_12 = arith.constant 0 : index
    %c0_13 = arith.constant 0 : index
    %c0_14 = arith.constant 0 : index
    %13 = vector.load %arg8[%c0_11, %c0_12, %c0_13, %c0_14] : memref<1x5x16x128xf32, #tpu.memory_space<vmem>>, vector<1x5x16x128xf32>
    %14 = vector.shape_cast %13 : vector<1x5x16x128xf32> to vector<5x16x128xf32>
    %c0_15 = arith.constant 0 : index
    %c0_16 = arith.constant 0 : index
    %c0_17 = arith.constant 0 : index
    %c0_18 = arith.constant 0 : index
    %15 = vector.load %arg7[%c0_15, %c0_16, %c0_17, %c0_18] : memref<1x5x16x128xf32, #tpu.memory_space<vmem>>, vector<1x5x16x128xf32>
    %16 = vector.shape_cast %15 : vector<1x5x16x128xf32> to vector<5x16x128xf32>
    %17 = vector.shape_cast %14 : vector<5x16x128xf32> to vector<1x5x16x128xf32>
    tpu.vector_store %arg7[%c0_15, %c0_16, %c0_17, %c0_18], %17 {strides = array<i32>} : memref<1x5x16x128xf32, #tpu.memory_space<vmem>>, vector<1x5x16x128xf32>,
    %c0_19 = arith.constant 0 : index
    %c0_20 = arith.constant 0 : index
    %c0_21 = arith.constant 0 : index
    %18 = vector.load %arg4[%c0_19, %c0_20, %c0_21] : memref<1x4x128xf32, #tpu.memory_space<vmem>>, vector<1x4x128xf32>
    %19 = vector.shape_cast %18 : vector<1x4x128xf32> to vector<1x4x128xf32>
    %20 = vector.broadcast %19 : vector<1x4x128xf32> to vector<5x4x128xf32>
    %c0_22 = arith.constant 0 : index
    %c0_23 = arith.constant 0 : index
    %c0_24 = arith.constant 0 : index
    %21 = vector.load %arg5[%c0_22, %c0_23, %c0_24] : memref<1x4x128xf32, #tpu.memory_space<vmem>>, vector<1x4x128xf32>
    %22 = vector.shape_cast %21 : vector<1x4x128xf32> to vector<1x4x128xf32>
    %23 = vector.broadcast %22 : vector<1x4x128xf32> to vector<5x4x128xf32>
    %c0_25 = arith.constant 0 : index
    %c0_26 = arith.constant 0 : index
    %c1 = arith.constant 1 : index
    %c0_27 = arith.constant 0 : index
    %24 = vector.load %arg6[%c0_25, %c0_26, %c1, %c0_27] : memref<1x5x16x128xf32, #tpu.memory_space<vmem>>, vector<1x5x4x128xf32>
    %25 = vector.shape_cast %24 : vector<1x5x4x128xf32> to vector<5x4x128xf32>
    %26 = vector.shape_cast %20 : vector<5x4x128xf32> to vector<1x5x4x128xf32>
    tpu.vector_store %arg6[%c0_25, %c0_26, %c1, %c0_27], %26 {strides = array<i32>} : memref<1x5x16x128xf32, #tpu.memory_space<vmem>>, vector<1x5x4x128xf32>,
    %c0_28 = arith.constant 0 : index
    %c0_29 = arith.constant 0 : index
    %c1_30 = arith.constant 1 : index
    %c0_31 = arith.constant 0 : index
    %27 = vector.load %arg7[%c0_28, %c0_29, %c1_30, %c0_31] : memref<1x5x16x128xf32, #tpu.memory_space<vmem>>, vector<1x5x4x128xf32>
    %28 = vector.shape_cast %27 : vector<1x5x4x128xf32> to vector<5x4x128xf32>
    %29 = vector.shape_cast %23 : vector<5x4x128xf32> to vector<1x5x4x128xf32>
    tpu.vector_store %arg7[%c0_28, %c0_29, %c1_30, %c0_31], %29 {strides = array<i32>} : memref<1x5x16x128xf32, #tpu.memory_space<vmem>>, vector<1x5x4x128xf32>,
    return
  }
  func.func @transform_1(%arg0: i32, %arg1: i32, %arg2: memref<5xi32, #tpu.memory_space<smem>>) -> (i32, i32, i32) {
    %c0_i32 = arith.constant 0 : i32
    %c0_i32_0 = arith.constant 0 : i32
    %c0_i32_1 = arith.constant 0 : i32
    return %arg1, %c0_i32, %c0_i32_0 : i32, i32, i32
  }
  func.func @transform_2(%arg0: i32, %arg1: i32, %arg2: memref<5xi32, #tpu.memory_space<smem>>) -> (i32, i32, i32) {
    %c0_i32 = arith.constant 0 : i32
    %c0_i32_0 = arith.constant 0 : i32
    %c0_i32_1 = arith.constant 0 : i32
    return %arg1, %c0_i32, %c0_i32_0 : i32, i32, i32
  }
  func.func @transform_3(%arg0: i32, %arg1: i32, %arg2: memref<5xi32, #tpu.memory_space<smem>>) -> (i32, i32, i32, i32) {
    %c0_i32 = arith.constant 0 : i32
    %c0_i32_0 = arith.constant 0 : i32
    %c0_i32_1 = arith.constant 0 : i32
    return %arg1, %arg0, %c0_i32, %c0_i32_0 : i32, i32, i32, i32
  }
  func.func @transform_4(%arg0: i32, %arg1: i32, %arg2: memref<5xi32, #tpu.memory_space<smem>>) -> (i32, i32, i32, i32) {
    %c0_i32 = arith.constant 0 : i32
    %c0_i32_0 = arith.constant 0 : i32
    %c0_i32_1 = arith.constant 0 : i32
    return %arg1, %arg0, %c0_i32, %c0_i32_0 : i32, i32, i32, i32
  }
}

</mosaic_0001>

<llo_original>
// kernel: tile.9
$region0: #{tile.9}
  %s0 = inlined_call_operand.vmem [shape: s32[2,5,16], index: 0, kind: input, shape index: {}]
  %s1 = inlined_call_operand.hbm [shape: s32[10,16], index: 1, kind: output, shape index: {}]
  $region1: #{tile.9} parent=0
    #allocation0 [shape = 'u8[8192]{0}', space=vmem, size = 0x2000, scoped, tag = 'operand span for operand 1']
    #allocation1 [shape = 's32[1]{0}', space=sflag, size = 0x4, scoped, tag = 'scoped memory for tile.9']
    %2 = vsyncpa [#allocation1], 0
    %v3 = vld [vmem:[%s0] sm:$0x1f]
    %vm4 = vcmask 130048
    %5 = vst.msk [vmem:[#allocation0] sm:$0x1f] %vm4, %v3
    %s6 = scalar_lea.vmem %s0, 8
    %v7 = vld [vmem:[%s6] sm:$0x1f]
    %vm8 = vcmask 130048
    %s9 = scalar_lea.vmem [#allocation0], 5
    %10 = vst.msk [vmem:[%s9] sm:$0x1f] %vm8, %v7
    %12 = vsyncadd [#allocation1], 0
    %s14 = sshll.u32 [#allocation0], 4
    %s15 = int_to_ptr.vmem [resolvable:$true] %s14
    %s16 = sshll.u32 %s1, 4
    %s17 = int_to_ptr.hbm [resolvable:$true] %s16
    %19 = dma.vmem_to_hbm [thread:$0]  %s15, 256, %s17, [#allocation1]
    %21 = dma.done [#allocation1], 256
    %22 = vsyncpa [#allocation1], 1

// kernel: prompt_learner_grouped_forward.1
$region0: #{prompt_learner_grouped_forward.1}
  #allocation0 [shape = 'u32[]', space=smem, size = 0x4, offset = 0x4, fixed_abs, tag = 'smem constant byte address 0x4 - core index']
  #allocation1 [shape = 'u32[72,128]{1,0:T(1,128)}', space=vmem, size = 0x9000, scoped, tag = 'internal scratch']
  #allocation2 [shape = 'f32[1,5,16,128]{3,2,1,0:T(8,128)}', space=vmem, size = 0xa000, scoped, tag = 'scratch operand']
  #allocation3 [shape = 's32[1]{0}', space=sflag, size = 0x4, scoped, tag = 'scratch operand']
  #allocation4 [shape = 's32[1]{0}', space=sflag, size = 0x4, scoped, tag = 'scoped memory for prompt_learner_grouped_forward.1']
  #allocation5 [shape = 'u8[512]{0}', space=smem, size = 0x200, scoped, tag = 'prefetched SMEM operand 0']
  #allocation10 [shape = 's32[]', space=sflag, size = 0x4, offset = 0, fixed_abs, tag = 'sflag constant byte address 0x0 - dummy sync flag']
  #allocation11 [shape = 's32[]', space=sflag, size = 0x4, offset = 0, fixed_abs, tag = 'sflag constant byte address 0x0 - dummy sync flag']
  #allocation12 [shape = 's32[]', space=sflag, size = 0x4, offset = 0, fixed_abs, tag = 'sflag constant byte address 0x0 - dummy sync flag']
  #allocation13 [shape = 's32[]', space=sflag, size = 0x4, offset = 0, fixed_abs, tag = 'sflag constant byte address 0x0 - dummy sync flag']
  #allocation14 [shape = 's32[]', space=sflag, size = 0x4, offset = 0, fixed_abs, tag = 'sflag constant byte address 0x0 - dummy sync flag']
  %s0 = inlined_call_operand.vmem [shape: s32[5], index: 0, kind: input, shape index: {}]
  %s1 = inlined_call_operand.vmem [shape: f32[6,16,128], index: 1, kind: input, shape index: {}]
  %s2 = inlined_call_operand.vmem [shape: f32[2,4,128], index: 2, kind: input, shape index: {}]
  %s3 = inlined_call_operand.vmem [shape: f32[2,4,128], index: 3, kind: input, shape index: {}]
  %s4 = inlined_call_operand.hbm [shape: f32[2,5,16,128], index: 4, kind: output, shape index: {0}]
  %s5 = inlined_call_operand.hbm [shape: f32[2,5,16,128], index: 5, kind: output, shape index: {1}]
  %6 = xla_tuple %s4, %s5
  %s7 = sld [smem:[#allocation0]]
  $region152: #{prompt_learner_grouped_forward.1} parent=0
    _
  %s9 = ssub.s32 1, %s7
  %s10 = scalar_select 0, %s9, %s7
  %s12 = sshll.u32 %s0, 4
  %s13 = int_to_ptr.vmem [resolvable:$true] %s12
  %15 = dma.vmem_to_smem %s13, 16, [#allocation5], [#allocation4]
  %17 = dma.done [#allocation4], 16
  %18 = sfence
  $region1: #{prompt_learner_grouped_forward.1} parent=0
    #allocation6 [shape = 'u8[81920]{0}', space=vmem, size = 0x14000, scoped, tag = 'output window, operand 0']
    #allocation7 [shape = 's32[2]{0}', space=sflag, size = 0x8, scoped, tag = 'scoped memory for prompt_learner_grouped_forward.1']
    #allocation8 [shape = 'u8[81920]{0}', space=vmem, size = 0x14000, scoped, tag = 'output window, operand 1']
    #allocation9 [shape = 's32[2]{0}', space=sflag, size = 0x8, scoped, tag = 'scoped memory for prompt_learner_grouped_forward.1']
    %19 = vsyncpa [#allocation7], 0
    %s20 = scalar_lea.sflag [#allocation7], 1
    %21 = vsyncpa %s20, 0
    %22 = vsyncpa [#allocation9], 0
    %s23 = scalar_lea.sflag [#allocation9], 1
    %24 = vsyncpa %s23, 0
    loop: start=0, step=1, limit=4
    $region2: #{prompt_learner_grouped_forward.1} parent=1 // loop_pre_header
      _
    $region3: #{prompt_learner_grouped_forward.1} parent=1 // loop_header
      %s26 = sphi 0, %s30
      %p27 = scmp.ge.s32.totalorder %s26, 4
      %s33 = sphi 0, %s45
      %s34 = sphi 0, %s41
      %s35 = sphi 0, %s33
      %s36 = sphi 0, %s34
      %s37 = sphi 0, %s35
      %s38 = sphi 0, %s36
      %s48 = sphi 0, %s50
      %s51 = sphi 0, %s48
      %s52 = sphi 0, %s51
      %s68 = sphi 0, %s52
      %s74 = sphi 0, %s76
      %s77 = sphi 0, %s74
      %s78 = sphi 0, %s77
      %s94 = sphi 0, %s78
      %s102 = sphi 0, %s104
      %s105 = sphi 0, %s102
      %s106 = sphi 0, %s105
      %s122 = sphi 0, %s106
      %s130 = sphi 0, %s132
      %s133 = sphi 0, %s130
      %s134 = sphi 0, %s133
      %s150 = sphi 0, %s134
    $region4: #{prompt_learner_grouped_forward.1} parent=1 // loop_header_branch
      %29 = sbr.rel (%p27) target = $region8
    $region5: #{prompt_learner_grouped_forward.1} parent=1 // loop_body
      %s31 = ssub.s32 %s26, 1
      %s32 = ssub.s32 %s26, 2
      %s39 = sadd.s32 1, %s34
      %p40 = scmp.ge.s32.totalorder %s39, 2
      %s41 = scalar_select %p40, 0, %s39
      %s42 = sadd.s32 1, %s33
      %s43 = scalar_select %p40, %s42, %s33
      %p44 = scmp.ge.s32.totalorder %s43, 1
      %s45 = scalar_select %p44, 0, %s43
      %s46 = ssub.s32 %s34, %s41
      %p47 = scmp.eq.s32.totalorder %s46, 0
      %s49 = sadd.s32 %s48, 1
      %s50 = scalar_select %p47, %s48, %s49
      %p53 = pneg %p47
      %p54 = scmp.eq.s32.totalorder %s26, 1
      %p55 = por %p53, %p54
      %p56 = scmp.ne.s32.totalorder %s48, %s51
      %p57 = scmp.eq.s32.totalorder %s26, 0
      %p58 = por %p56, %p57
      %p59 = scmp.ne.s32.totalorder %s48, %s51
      %p60 = scmp.eq.s32.totalorder %s31, 1
      %p61 = por %p59, %p60
      %p62 = scmp.ne.s32.totalorder %s51, %s52
      %p63 = scmp.eq.s32.totalorder %s31, 0
      %p64 = por %p62, %p63
      %p65 = scmp.ne.s32.totalorder %s51, %s52
      %p66 = scmp.eq.s32.totalorder %s32, 1
      %p67 = por %p65, %p66
      %p69 = scmp.ne.s32.totalorder %s52, %s68
      %p70 = scmp.eq.s32.totalorder %s32, 0
      %p71 = por %p69, %p70
      %s72 = ssub.s32 %s34, %s41
      %p73 = scmp.eq.s32.totalorder %s72, 0
      %s75 = sadd.s32 %s74, 1
      %s76 = scalar_select %p73, %s74, %s75
      %p79 = pneg %p73
      %p80 = scmp.eq.s32.totalorder %s26, 1
      %p81 = por %p79, %p80
      %p82 = scmp.ne.s32.totalorder %s74, %s77
      %p83 = scmp.eq.s32.totalorder %s26, 0
      %p84 = por %p82, %p83
      %p85 = scmp.ne.s32.totalorder %s74, %s77
      %p86 = scmp.eq.s32.totalorder %s31, 1
      %p87 = por %p85, %p86
      %p88 = scmp.ne.s32.totalorder %s77, %s78
      %p89 = scmp.eq.s32.totalorder %s31, 0
      %p90 = por %p88, %p89
      %p91 = scmp.ne.s32.totalorder %s77, %s78
      %p92 = scmp.eq.s32.totalorder %s32, 1
      %p93 = por %p91, %p92
      %p95 = scmp.ne.s32.totalorder %s78, %s94
      %p96 = scmp.eq.s32.totalorder %s32, 0
      %p97 = por %p95, %p96
      %s98 = ssub.s32 %s34, %s41
      %s99 = ssub.s32 %s33, %s45
      %s100 = sor.u32 %s98, %s99
      %p101 = scmp.eq.s32.totalorder %s100, 0
      %s103 = sadd.s32 %s102, 1
      %s104 = scalar_select %p101, %s102, %s103
      %p107 = pneg %p101
      %p108 = scmp.eq.s32.totalorder %s26, 1
      %p109 = por %p107, %p108
      %p110 = scmp.ne.s32.totalorder %s102, %s105
      %p111 = scmp.eq.s32.totalorder %s26, 0
      %p112 = por %p110, %p111
      %p113 = scmp.ne.s32.totalorder %s102, %s105
      %p114 = scmp.eq.s32.totalorder %s31, 1
      %p115 = por %p113, %p114
      %p116 = scmp.ne.s32.totalorder %s105, %s106
      %p117 = scmp.eq.s32.totalorder %s31, 0
      %p118 = por %p116, %p117
      %p119 = scmp.ne.s32.totalorder %s105, %s106
      %p120 = scmp.eq.s32.totalorder %s32, 1
      %p121 = por %p119, %p120
      %p123 = scmp.ne.s32.totalorder %s106, %s122
      %p124 = scmp.eq.s32.totalorder %s32, 0
      %p125 = por %p123, %p124
      %s126 = ssub.s32 %s34, %s41
      %s127 = ssub.s32 %s33, %s45
      %s128 = sor.u32 %s126, %s127
      %p129 = scmp.eq.s32.totalorder %s128, 0
      %s131 = sadd.s32 %s130, 1
      %s132 = scalar_select %p129, %s130, %s131
      %p135 = pneg %p129
      %p136 = scmp.eq.s32.totalorder %s26, 1
      %p137 = por %p135, %p136
      %p138 = scmp.ne.s32.totalorder %s130, %s133
      %p139 = scmp.eq.s32.totalorder %s26, 0
      %p140 = por %p138, %p139
      %p141 = scmp.ne.s32.totalorder %s130, %s133
      %p142 = scmp.eq.s32.totalorder %s31, 1
      %p143 = por %p141, %p142
      %p144 = scmp.ne.s32.totalorder %s133, %s134
      %p145 = scmp.eq.s32.totalorder %s31, 0
      %p146 = por %p144, %p145
      %p147 = scmp.ne.s32.totalorder %s133, %s134
      %p148 = scmp.eq.s32.totalorder %s32, 1
      %p149 = por %p147, %p148
      %p151 = scmp.ne.s32.totalorder %s134, %s150
      %p152 = scmp.eq.s32.totalorder %s32, 0
      %p153 = por %p151, %p152
      %p154 = scmp.le.s32.totalorder 1, %s26
      %p155 = scmp.lt.s32.totalorder %s26, 3
      %p156 = pnand %p154, %p155
      %p157 = pneg %p156
      // Predicated region
      $region9: #{prompt_learner_grouped_forward.1} parent=5 // pred_check
        _
      $region10: #{prompt_learner_grouped_forward.1} parent=5 // pred_check_branch
        %159 = sbr.rel (%p156) target = $region12
      $region11: #{prompt_learner_grouped_forward.1} parent=5 // pred_region
        %s160 = ssub.s32 %s26, 1
      $region12: #{prompt_learner_grouped_forward.1} parent=5 // pred_fallthru
        _
      %p161 = scmp.lt.s32.totalorder %s26, 2
      // Predicated region
      $region13: #{prompt_learner_grouped_forward.1} parent=5 // pred_check
        %p162 = pneg %p161
      $region14: #{prompt_learner_grouped_forward.1} parent=5 // pred_check_branch
        %164 = sbr.rel (%p162) target = $region16
      $region15: #{prompt_learner_grouped_forward.1} parent=5 // pred_region
        // Predicated region
        $region17: #{prompt_learner_grouped_forward.1} parent=15 // pred_check
          %p165 = pneg %p58
        $region18: #{prompt_learner_grouped_forward.1} parent=15 // pred_check_branch
          %167 = sbr.rel (%p165) target = $region20
        $region19: #{prompt_learner_grouped_forward.1} parent=15 // pred_region
          %p168 = scmp.lt.s32.totalorder %s34, 1
          %s169 = scalar_select %p168, %s34, 1
          %s170 = smul.addr %s169, 4
          %s171 = scalar_lea.vmem %s2, %s170
        $region20: #{prompt_learner_grouped_forward.1} parent=15 // pred_fallthru
          _
        // Predicated region
        $region21: #{prompt_learner_grouped_forward.1} parent=15 // pred_check
          %p172 = pneg %p84
        $region22: #{prompt_learner_grouped_forward.1} parent=15 // pred_check_branch
          %174 = sbr.rel (%p172) target = $region24
        $region23: #{prompt_learner_grouped_forward.1} parent=15 // pred_region
          %p175 = scmp.lt.s32.totalorder %s34, 1
          %s176 = scalar_select %p175, %s34, 1
          %s177 = smul.addr %s176, 4
          %s178 = scalar_lea.vmem %s3, %s177
        $region24: #{prompt_learner_grouped_forward.1} parent=15 // pred_fallthru
          _
      $region16: #{prompt_learner_grouped_forward.1} parent=5 // pred_fallthru
        _
      %p179 = scmp.le.s32.totalorder 1, %s26
      %p180 = scmp.lt.s32.totalorder %s26, 3
      %p181 = pnand %p179, %p180
      %p182 = pneg %p181
      // Predicated region
      $region25: #{prompt_learner_grouped_forward.1} parent=5 // pred_check
        _
      $region26: #{prompt_learner_grouped_forward.1} parent=5 // pred_check_branch
        %184 = sbr.rel (%p181) target = $region28
      $region27: #{prompt_learner_grouped_forward.1} parent=5 // pred_region
        %s185 = ssub.s32 %s26, 1
        %p186 = scmp.lt.s32.totalorder %s36, 1
        %s187 = scalar_select %p186, %s36, 1
        %s188 = smul.addr %s187, 4
        %s189 = scalar_lea.vmem %s2, %s188
        %p190 = pneg %p64
        %p191 = pneg %p61
        %p192 = scmp.lt.s32.totalorder %s36, 1
        %s193 = scalar_select %p192, %s36, 1
        %s194 = smul.addr %s193, 4
        %s195 = scalar_lea.vmem %s3, %s194
        %p196 = pneg %p90
        %p197 = pneg %p87
        %p198 = pneg %p118
        %p199 = pneg %p115
        %s200 = sand.u32 %s105, 1
        %s201 = scalar_lea.sflag [#allocation7], %s200
        %s202 = sand.u32 %s105, 1
        %s203 = smul.addr %s202, 80
        %s204 = scalar_lea.vmem [#allocation6], %s203
        %p205 = pneg %p146
        %p206 = pneg %p143
        %s207 = sand.u32 %s133, 1
        %s208 = scalar_lea.sflag [#allocation9], %s207
        %s209 = sand.u32 %s133, 1
        %s210 = smul.addr %s209, 80
        %s211 = scalar_lea.vmem [#allocation8], %s210
        %p212 = scmp.lt.s32.totalorder %s36, 1
        %s213 = scalar_select %p212, %s36, 1
        %s214 = smul.addr %s213, 4
        %s215 = scalar_lea.vmem %s2, %s214
        %p216 = scmp.lt.s32.totalorder %s36, 1
        %s217 = scalar_select %p216, %s36, 1
        %s218 = smul.addr %s217, 4
        %s219 = scalar_lea.vmem %s3, %s218
        %s220 = smul.u32 5, %s35
        %s221 = smul.u32 5, %s35
        %p222 = scmp.eq.s32.totalorder %s35, 0
        %p223 = scmp.eq.s32.totalorder %s36, 0
        %p224 = pnand %p222, %p223
        %p225 = pneg %p224
        // Predicated region
        $region29: #{prompt_learner_grouped_forward.1} parent=27 // pred_check
          _
        $region30: #{prompt_learner_grouped_forward.1} parent=27 // pred_check_branch
          %227 = sbr.rel (%p224) target = $region32
        $region31: #{prompt_learner_grouped_forward.1} parent=27 // pred_region
          %s228 = sld [smem:[#allocation5]]
          %s229 = smul.u32 %s228, 16
          %s230 = scalar_lea.vmem %s1, %s229
          // Predicated region
          $region33: #{prompt_learner_grouped_forward.1} parent=31 // pred_check
            _
          $region34: #{prompt_learner_grouped_forward.1} parent=31 // pred_check_branch
            %232 = sbr.rel (0) target = $region36
          $region35: #{prompt_learner_grouped_forward.1} parent=31 // pred_region
            loop: start=0, step=1, limit=1
            $region37: #{prompt_learner_grouped_forward.1} parent=35 // loop_pre_header
              _
            $region38: #{prompt_learner_grouped_forward.1} parent=35 // loop_header
              %s234 = sphi 0, %s238
              %p235 = scmp.ge.s32.totalorder %s234, 1
              %s239 = sphi %s230, %s230
              %s240 = sphi [#allocation2], [#allocation2]
            $region39: #{prompt_learner_grouped_forward.1} parent=35 // loop_header_branch
              %237 = sbr.rel (%p235) target = $region43
            $region40: #{prompt_learner_grouped_forward.1} parent=35 // loop_body
              %v241 = vld [vmem:[%s239] sm:$0xff]
              %242 = vst [vmem:[%s240] sm:$0xff] %v241
              %v243 = vld [vmem:[%s239 + $0x8] sm:$0xff]
              %244 = vst [vmem:[%s240 + $0x8] sm:$0xff] %v243
            $region41: #{prompt_learner_grouped_forward.1} parent=35 // loop_footer
              %s238 = sadd.s32 1, %s234
            $region42: #{prompt_learner_grouped_forward.1} parent=35 // loop_footer_branch
              %233 = sbr.rel target = $region38
            $region43: #{prompt_learner_grouped_forward.1} parent=35 // loop_exit
              _
          $region36: #{prompt_learner_grouped_forward.1} parent=31 // pred_fallthru
            _
          // Predicated region
          $region44: #{prompt_learner_grouped_forward.1} parent=31 // pred_check
            _
          $region45: #{prompt_learner_grouped_forward.1} parent=31 // pred_check_branch
            %246 = sbr.rel target = $region47
          $region46: #{prompt_learner_grouped_forward.1} parent=31 // pred_region
            _
          $region47: #{prompt_learner_grouped_forward.1} parent=31 // pred_fallthru
            _
          // Predicated region
          $region48: #{prompt_learner_grouped_forward.1} parent=31 // pred_check
            _
          $region49: #{prompt_learner_grouped_forward.1} parent=31 // pred_check_branch
            %249 = sbr.rel (0) target = $region51
          $region50: #{prompt_learner_grouped_forward.1} parent=31 // pred_region
            %250 = vsyncadd [#allocation3], 256
          $region51: #{prompt_learner_grouped_forward.1} parent=31 // pred_fallthru
            _
          %s251 = sld [smem:[#allocation5 + $0x1]]
          %s252 = smul.u32 %s251, 16
          %s253 = scalar_lea.vmem %s1, %s252
          %s254 = scalar_lea.vmem [#allocation2], 16
          // Predicated region
          $region52: #{prompt_learner_grouped_forward.1} parent=31 // pred_check
            _
          $region53: #{prompt_learner_grouped_forward.1} parent=31 // pred_check_branch
            %256 = sbr.rel (0) target = $region55
          $region54: #{prompt_learner_grouped_forward.1} parent=31 // pred_region
            loop: start=0, step=1, limit=1
            $region56: #{prompt_learner_grouped_forward.1} parent=54 // loop_pre_header
              _
            $region57: #{prompt_learner_grouped_forward.1} parent=54 // loop_header
              %s258 = sphi 0, %s262
              %p259 = scmp.ge.s32.totalorder %s258, 1
              %s263 = sphi %s253, %s253
              %s264 = sphi %s254, %s254
            $region58: #{prompt_learner_grouped_forward.1} parent=54 // loop_header_branch
              %261 = sbr.rel (%p259) target = $region62
            $region59: #{prompt_learner_grouped_forward.1} parent=54 // loop_body
              %v265 = vld [vmem:[%s263] sm:$0xff]
              %266 = vst [vmem:[%s264] sm:$0xff] %v265
              %v267 = vld [vmem:[%s263 + $0x8] sm:$0xff]
              %268 = vst [vmem:[%s264 + $0x8] sm:$0xff] %v267
            $region60: #{prompt_learner_grouped_forward.1} parent=54 // loop_footer
              %s262 = sadd.s32 1, %s258
            $region61: #{prompt_learner_grouped_forward.1} parent=54 // loop_footer_branch
              %257 = sbr.rel target = $region57
            $region62: #{prompt_learner_grouped_forward.1} parent=54 // loop_exit
              _
          $region55: #{prompt_learner_grouped_forward.1} parent=31 // pred_fallthru
            _
          // Predicated region
          $region63: #{prompt_learner_grouped_forward.1} parent=31 // pred_check
            _
          $region64: #{prompt_learner_grouped_forward.1} parent=31 // pred_check_branch
            %270 = sbr.rel target = $region66
          $region65: #{prompt_learner_grouped_forward.1} parent=31 // pred_region
            _
          $region66: #{prompt_learner_grouped_forward.1} parent=31 // pred_fallthru
            _
          // Predicated region
          $region67: #{prompt_learner_grouped_forward.1} parent=31 // pred_check
            _
          $region68: #{prompt_learner_grouped_forward.1} parent=31 // pred_check_branch
            %273 = sbr.rel (0) target = $region70
          $region69: #{prompt_learner_grouped_forward.1} parent=31 // pred_region
            %274 = vsyncadd [#allocation3], 256
          $region70: #{prompt_learner_grouped_forward.1} parent=31 // pred_fallthru
            _
          %s275 = sld [smem:[#allocation5 + $0x2]]
          %s276 = smul.u32 %s275, 16
          %s277 = scalar_lea.vmem %s1, %s276
          %s278 = scalar_lea.vmem [#allocation2], 32
          // Predicated region
          $region71: #{prompt_learner_grouped_forward.1} parent=31 // pred_check
            _
          $region72: #{prompt_learner_grouped_forward.1} parent=31 // pred_check_branch
            %280 = sbr.rel (0) target = $region74
          $region73: #{prompt_learner_grouped_forward.1} parent=31 // pred_region
            loop: start=0, step=1, limit=1
            $region75: #{prompt_learner_grouped_forward.1} parent=73 // loop_pre_header
              _
            $region76: #{prompt_learner_grouped_forward.1} parent=73 // loop_header
              %s282 = sphi 0, %s286
              %p283 = scmp.ge.s32.totalorder %s282, 1
              %s287 = sphi %s277, %s277
              %s288 = sphi %s278, %s278
            $region77: #{prompt_learner_grouped_forward.1} parent=73 // loop_header_branch
              %285 = sbr.rel (%p283) target = $region81
            $region78: #{prompt_learner_grouped_forward.1} parent=73 // loop_body
              %v289 = vld [vmem:[%s287] sm:$0xff]
              %290 = vst [vmem:[%s288] sm:$0xff] %v289
              %v291 = vld [vmem:[%s287 + $0x8] sm:$0xff]
              %292 = vst [vmem:[%s288 + $0x8] sm:$0xff] %v291
            $region79: #{prompt_learner_grouped_forward.1} parent=73 // loop_footer
              %s286 = sadd.s32 1, %s282
            $region80: #{prompt_learner_grouped_forward.1} parent=73 // loop_footer_branch
              %281 = sbr.rel target = $region76
            $region81: #{prompt_learner_grouped_forward.1} parent=73 // loop_exit
              _
          $region74: #{prompt_learner_grouped_forward.1} parent=31 // pred_fallthru
            _
          // Predicated region
          $region82: #{prompt_learner_grouped_forward.1} parent=31 // pred_check
            _
          $region83: #{prompt_learner_grouped_forward.1} parent=31 // pred_check_branch
            %294 = sbr.rel target = $region85
          $region84: #{prompt_learner_grouped_forward.1} parent=31 // pred_region
            _
          $region85: #{prompt_learner_grouped_forward.1} parent=31 // pred_fallthru
            _
          // Predicated region
          $region86: #{prompt_learner_grouped_forward.1} parent=31 // pred_check
            _
          $region87: #{prompt_learner_grouped_forward.1} parent=31 // pred_check_branch
            %297 = sbr.rel (0) target = $region89
          $region88: #{prompt_learner_grouped_forward.1} parent=31 // pred_region
            %298 = vsyncadd [#allocation3], 256
          $region89: #{prompt_learner_grouped_forward.1} parent=31 // pred_fallthru
            _
          %s299 = sld [smem:[#allocation5 + $0x3]]
          %s300 = smul.u32 %s299, 16
          %s301 = scalar_lea.vmem %s1, %s300
          %s302 = scalar_lea.vmem [#allocation2], 48
          // Predicated region
          $region90: #{prompt_learner_grouped_forward.1} parent=31 // pred_check
            _
          $region91: #{prompt_learner_grouped_forward.1} parent=31 // pred_check_branch
            %304 = sbr.rel (0) target = $region93
          $region92: #{prompt_learner_grouped_forward.1} parent=31 // pred_region
            loop: start=0, step=1, limit=1
            $region94: #{prompt_learner_grouped_forward.1} parent=92 // loop_pre_header
              _
            $region95: #{prompt_learner_grouped_forward.1} parent=92 // loop_header
              %s306 = sphi 0, %s310
              %p307 = scmp.ge.s32.totalorder %s306, 1
              %s311 = sphi %s301, %s301
              %s312 = sphi %s302, %s302
            $region96: #{prompt_learner_grouped_forward.1} parent=92 // loop_header_branch
              %309 = sbr.rel (%p307) target = $region100
            $region97: #{prompt_learner_grouped_forward.1} parent=92 // loop_body
              %v313 = vld [vmem:[%s311] sm:$0xff]
              %314 = vst [vmem:[%s312] sm:$0xff] %v313
              %v315 = vld [vmem:[%s311 + $0x8] sm:$0xff]
              %316 = vst [vmem:[%s312 + $0x8] sm:$0xff] %v315
            $region98: #{prompt_learner_grouped_forward.1} parent=92 // loop_footer
              %s310 = sadd.s32 1, %s306
            $region99: #{prompt_learner_grouped_forward.1} parent=92 // loop_footer_branch
              %305 = sbr.rel target = $region95
            $region100: #{prompt_learner_grouped_forward.1} parent=92 // loop_exit
              _
          $region93: #{prompt_learner_grouped_forward.1} parent=31 // pred_fallthru
            _
          // Predicated region
          $region101: #{prompt_learner_grouped_forward.1} parent=31 // pred_check
            _
          $region102: #{prompt_learner_grouped_forward.1} parent=31 // pred_check_branch
            %318 = sbr.rel target = $region104
          $region103: #{prompt_learner_grouped_forward.1} parent=31 // pred_region
            _
          $region104: #{prompt_learner_grouped_forward.1} parent=31 // pred_fallthru
            _
          // Predicated region
          $region105: #{prompt_learner_grouped_forward.1} parent=31 // pred_check
            _
          $region106: #{prompt_learner_grouped_forward.1} parent=31 // pred_check_branch
            %321 = sbr.rel (0) target = $region108
          $region107: #{prompt_learner_grouped_forward.1} parent=31 // pred_region
            %322 = vsyncadd [#allocation3], 256
          $region108: #{prompt_learner_grouped_forward.1} parent=31 // pred_fallthru
            _
          %s323 = sld [smem:[#allocation5 + $0x4]]
          %s324 = smul.u32 %s323, 16
          %s325 = scalar_lea.vmem %s1, %s324
          %s326 = scalar_lea.vmem [#allocation2], 64
          // Predicated region
          $region109: #{prompt_learner_grouped_forward.1} parent=31 // pred_check
            _
          $region110: #{prompt_learner_grouped_forward.1} parent=31 // pred_check_branch
            %328 = sbr.rel (0) target = $region112
          $region111: #{prompt_learner_grouped_forward.1} parent=31 // pred_region
            loop: start=0, step=1, limit=1
            $region113: #{prompt_learner_grouped_forward.1} parent=111 // loop_pre_header
              _
            $region114: #{prompt_learner_grouped_forward.1} parent=111 // loop_header
              %s330 = sphi 0, %s334
              %p331 = scmp.ge.s32.totalorder %s330, 1
              %s335 = sphi %s325, %s325
              %s336 = sphi %s326, %s326
            $region115: #{prompt_learner_grouped_forward.1} parent=111 // loop_header_branch
              %333 = sbr.rel (%p331) target = $region119
            $region116: #{prompt_learner_grouped_forward.1} parent=111 // loop_body
              %v337 = vld [vmem:[%s335] sm:$0xff]
              %338 = vst [vmem:[%s336] sm:$0xff] %v337
              %v339 = vld [vmem:[%s335 + $0x8] sm:$0xff]
              %340 = vst [vmem:[%s336 + $0x8] sm:$0xff] %v339
            $region117: #{prompt_learner_grouped_forward.1} parent=111 // loop_footer
              %s334 = sadd.s32 1, %s330
            $region118: #{prompt_learner_grouped_forward.1} parent=111 // loop_footer_branch
              %329 = sbr.rel target = $region114
            $region119: #{prompt_learner_grouped_forward.1} parent=111 // loop_exit
              _
          $region112: #{prompt_learner_grouped_forward.1} parent=31 // pred_fallthru
            _
          // Predicated region
          $region120: #{prompt_learner_grouped_forward.1} parent=31 // pred_check
            _
          $region121: #{prompt_learner_grouped_forward.1} parent=31 // pred_check_branch
            %342 = sbr.rel target = $region123
          $region122: #{prompt_learner_grouped_forward.1} parent=31 // pred_region
            _
          $region123: #{prompt_learner_grouped_forward.1} parent=31 // pred_fallthru
            _
          // Predicated region
          $region124: #{prompt_learner_grouped_forward.1} parent=31 // pred_check
            _
          $region125: #{prompt_learner_grouped_forward.1} parent=31 // pred_check_branch
            %345 = sbr.rel (0) target = $region127
          $region126: #{prompt_learner_grouped_forward.1} parent=31 // pred_region
            %346 = vsyncadd [#allocation3], 256
          $region127: #{prompt_learner_grouped_forward.1} parent=31 // pred_fallthru
            _
        $region32: #{prompt_learner_grouped_forward.1} parent=27 // pred_fallthru
          _
        // Predicated region
        $region128: #{prompt_learner_grouped_forward.1} parent=27 // pred_check
          %p347 = pneg %p223
        $region129: #{prompt_learner_grouped_forward.1} parent=27 // pred_check_branch
          %349 = sbr.rel (%p347) target = $region131
        $region130: #{prompt_learner_grouped_forward.1} parent=27 // pred_region
          %s350 = smul.u32 16, 1
          %s351 = sshll.u32 %s350, 4
          %352 = dma.done [#allocation3], %s351
          %s353 = sshll.u32 %s350, 4
          %354 = dma.done [#allocation3], %s353
          %s355 = sshll.u32 %s350, 4
          %356 = dma.done [#allocation3], %s355
          %s357 = sshll.u32 %s350, 4
          %358 = dma.done [#allocation3], %s357
          %s359 = sshll.u32 %s350, 4
          %360 = dma.done [#allocation3], %s359
        $region131: #{prompt_learner_grouped_forward.1} parent=27 // pred_fallthru
          _
        %v361 = vld [vmem:[#allocation2] sm:$0xff]
        %v362 = vld [vmem:[#allocation2 + $0x8] sm:$0xff]
        %v363 = vld [vmem:[#allocation2 + $0x10] sm:$0xff]
        %v364 = vld [vmem:[#allocation2 + $0x18] sm:$0xff]
        %v365 = vld [vmem:[#allocation2 + $0x20] sm:$0xff]
        %v366 = vld [vmem:[#allocation2 + $0x28] sm:$0xff]
        %v367 = vld [vmem:[#allocation2 + $0x30] sm:$0xff]
        %v368 = vld [vmem:[#allocation2 + $0x38] sm:$0xff]
        %v369 = vld [vmem:[#allocation2 + $0x40] sm:$0xff]
        %v370 = vld [vmem:[#allocation2 + $0x48] sm:$0xff]
        %371 = vst [vmem:[%s204] sm:$0xff] %v361
        %372 = vst [vmem:[%s204 + $0x8] sm:$0xff] %v362
        %373 = vst [vmem:[%s204 + $0x10] sm:$0xff] %v363
        %374 = vst [vmem:[%s204 + $0x18] sm:$0xff] %v364
        %375 = vst [vmem:[%s204 + $0x20] sm:$0xff] %v365
        %376 = vst [vmem:[%s204 + $0x28] sm:$0xff] %v366
        %377 = vst [vmem:[%s204 + $0x30] sm:$0xff] %v367
        %378 = vst [vmem:[%s204 + $0x38] sm:$0xff] %v368
        %379 = vst [vmem:[%s204 + $0x40] sm:$0xff] %v369
        %380 = vst [vmem:[%s204 + $0x48] sm:$0xff] %v370
        %v381 = vld [vmem:[#allocation2] sm:$0xff]
        %v382 = vld [vmem:[#allocation2 + $0x8] sm:$0xff]
        %v383 = vld [vmem:[#allocation2 + $0x10] sm:$0xff]
        %v384 = vld [vmem:[#allocation2 + $0x18] sm:$0xff]
        %v385 = vld [vmem:[#allocation2 + $0x20] sm:$0xff]
        %v386 = vld [vmem:[#allocation2 + $0x28] sm:$0xff]
        %v387 = vld [vmem:[#allocation2 + $0x30] sm:$0xff]
        %v388 = vld [vmem:[#allocation2 + $0x38] sm:$0xff]
        %v389 = vld [vmem:[#allocation2 + $0x40] sm:$0xff]
        %v390 = vld [vmem:[#allocation2 + $0x48] sm:$0xff]
        %391 = vst [vmem:[%s211] sm:$0xff] %v381
        %392 = vst [vmem:[%s211 + $0x8] sm:$0xff] %v382
        %393 = vst [vmem:[%s211 + $0x10] sm:$0xff] %v383
        %394 = vst [vmem:[%s211 + $0x18] sm:$0xff] %v384
        %395 = vst [vmem:[%s211 + $0x20] sm:$0xff] %v385
        %396 = vst [vmem:[%s211 + $0x28] sm:$0xff] %v386
        %397 = vst [vmem:[%s211 + $0x30] sm:$0xff] %v387
        %398 = vst [vmem:[%s211 + $0x38] sm:$0xff] %v388
        %399 = vst [vmem:[%s211 + $0x40] sm:$0xff] %v389
        %400 = vst [vmem:[%s211 + $0x48] sm:$0xff] %v390
        %v401 = vld [vmem:[%s215] sm:$0xf]
        %v402 = vld [vmem:[%s219] sm:$0xf]
        %403 = vst [vmem:[%s204 + $0x1] sm:$0xf] %v401
        %404 = vst [vmem:[%s204 + $0x11] sm:$0xf] %v401
        %405 = vst [vmem:[%s204 + $0x21] sm:$0xf] %v401
        %406 = vst [vmem:[%s204 + $0x31] sm:$0xf] %v401
        %407 = vst [vmem:[%s204 + $0x41] sm:$0xf] %v401
        %408 = vst [vmem:[%s211 + $0x1] sm:$0xf] %v402
        %409 = vst [vmem:[%s211 + $0x11] sm:$0xf] %v402
        %410 = vst [vmem:[%s211 + $0x21] sm:$0xf] %v402
        %411 = vst [vmem:[%s211 + $0x31] sm:$0xf] %v402
        %412 = vst [vmem:[%s211 + $0x41] sm:$0xf] %v402
        %s413 = sand.u32 %s105, 1
        %s414 = scalar_lea.sflag [#allocation7], %s413
        %s415 = sand.u32 %s105, 1
        %s416 = smul.addr %s415, 80
        %s417 = scalar_lea.vmem [#allocation6], %s416
        %s418 = sand.u32 %s133, 1
        %s419 = scalar_lea.sflag [#allocation9], %s418
        %s420 = sand.u32 %s133, 1
        %s421 = smul.addr %s420, 80
        %s422 = scalar_lea.vmem [#allocation8], %s421
        // Predicated region
        $region132: #{prompt_learner_grouped_forward.1} parent=27 // pred_check
          %p423 = pneg %p115
        $region133: #{prompt_learner_grouped_forward.1} parent=27 // pred_check_branch
          %425 = sbr.rel (%p423) target = $region135
        $region134: #{prompt_learner_grouped_forward.1} parent=27 // pred_region
          %s426 = smul.u32 5, %s35
          %428 = vsyncadd %s414, 0
          %s429 = smul.addr %s426, 2
          %s430 = smul.addr %s36, 10
          %s431 = sadd.s32 %s429, %s430
          %s432 = smul.addr %s431, 8
          %s433 = scalar_lea.hbm %s4, %s432
          %s434 = sshll.u32 %s417, 4
          %s435 = int_to_ptr.vmem [resolvable:$true] %s434
          %s436 = sshll.u32 %s433, 4
          %s437 = int_to_ptr.hbm [resolvable:$true] %s436
          %442 = dma.vmem_to_hbm [thread:$0]  %s435, 1280, %s437, %s414, 128, 128, 8
        $region135: #{prompt_learner_grouped_forward.1} parent=27 // pred_fallthru
          _
        // Predicated region
        $region136: #{prompt_learner_grouped_forward.1} parent=27 // pred_check
          %p443 = pneg %p143
        $region137: #{prompt_learner_grouped_forward.1} parent=27 // pred_check_branch
          %445 = sbr.rel (%p443) target = $region139
        $region138: #{prompt_learner_grouped_forward.1} parent=27 // pred_region
          %s446 = smul.u32 5, %s35
          %448 = vsyncadd %s419, 0
          %s449 = smul.addr %s446, 2
          %s450 = smul.addr %s36, 10
          %s451 = sadd.s32 %s449, %s450
          %s452 = smul.addr %s451, 8
          %s453 = scalar_lea.hbm %s5, %s452
          %s454 = sshll.u32 %s422, 4
          %s455 = int_to_ptr.vmem [resolvable:$true] %s454
          %s456 = sshll.u32 %s453, 4
          %s457 = int_to_ptr.hbm [resolvable:$true] %s456
          %462 = dma.vmem_to_hbm [thread:$0]  %s455, 1280, %s457, %s419, 128, 128, 8
        $region139: #{prompt_learner_grouped_forward.1} parent=27 // pred_fallthru
          _
      $region28: #{prompt_learner_grouped_forward.1} parent=5 // pred_fallthru
        _
      %p463 = scmp.le.s32.totalorder 2, %s26
      // Predicated region
      $region140: #{prompt_learner_grouped_forward.1} parent=5 // pred_check
        %p464 = pneg %p463
      $region141: #{prompt_learner_grouped_forward.1} parent=5 // pred_check_branch
        %466 = sbr.rel (%p464) target = $region143
      $region142: #{prompt_learner_grouped_forward.1} parent=5 // pred_region
        %s467 = ssub.s32 %s26, 2
        // Predicated region
        $region144: #{prompt_learner_grouped_forward.1} parent=142 // pred_check
          %p468 = pneg %p121
        $region145: #{prompt_learner_grouped_forward.1} parent=142 // pred_check_branch
          %470 = sbr.rel (%p468) target = $region147
        $region146: #{prompt_learner_grouped_forward.1} parent=142 // pred_region
          %s471 = sand.u32 %s106, 1
          %s472 = scalar_lea.sflag [#allocation7], %s471
          %s473 = sand.u32 %s106, 1
          %s474 = smul.addr %s473, 80
          %s475 = scalar_lea.vmem [#allocation6], %s474
          %477 = dma.done %s472, 1280
        $region147: #{prompt_learner_grouped_forward.1} parent=142 // pred_fallthru
          _
        // Predicated region
        $region148: #{prompt_learner_grouped_forward.1} parent=142 // pred_check
          %p478 = pneg %p149
        $region149: #{prompt_learner_grouped_forward.1} parent=142 // pred_check_branch
          %480 = sbr.rel (%p478) target = $region151
        $region150: #{prompt_learner_grouped_forward.1} parent=142 // pred_region
          %s481 = sand.u32 %s134, 1
          %s482 = scalar_lea.sflag [#allocation9], %s481
          %s483 = sand.u32 %s134, 1
          %s484 = smul.addr %s483, 80
          %s485 = scalar_lea.vmem [#allocation8], %s484
          %487 = dma.done %s482, 1280
        $region151: #{prompt_learner_grouped_forward.1} parent=142 // pred_fallthru
          _
      $region143: #{prompt_learner_grouped_forward.1} parent=5 // pred_fallthru
        _
    $region6: #{prompt_learner_grouped_forward.1} parent=1 // loop_footer
      %s30 = sadd.s32 1, %s26
    $region7: #{prompt_learner_grouped_forward.1} parent=1 // loop_footer_branch
      %25 = sbr.rel target = $region3
    $region8: #{prompt_learner_grouped_forward.1} parent=1 // loop_exit
      _
    %488 = vsyncpa [#allocation7], 1
    %s489 = scalar_lea.sflag [#allocation7], 1
    %490 = vsyncpa %s489, 1
    %491 = vsyncpa [#allocation9], 1
    %s492 = scalar_lea.sflag [#allocation9], 1
    %493 = vsyncpa %s492, 1
  %494 = vsyncmov [#allocation3]
  %s495 = vpop.sfrf %494
  %p496 = scmp.eq.s32.totalorder %s495, 0
  %p497 = pneg %p496
  %499 = shalt.err (%p497)

</llo_original>
